<compile_context>
chip_gen: v6e
topology: v6e:2x2x1
jax: 0.10.0
libtpu: 0.0.40
codegen_flags: <defaults>
</compile_context>

<pallas_src>
import math

import jax
import jax.numpy as jnp
from jax.experimental import pallas as pl
from jax.experimental.pallas import tpu as pltpu


def _partition_kernel(x_ref, scat_ref, pe_ref, o_ref):
    # x_ref   : (C, TT, D)  one T-tile of one batch element, original NCTD layout
    # scat_ref: (C*D, J)    one-hot scatter, row c*D+d -> column d*C+c (VMEM-resident)
    # pe_ref  : (T, J)      full positional-encoding table (VMEM-resident)
    # o_ref   : (TT, J)     out[t, d*C + c] = x[c, t, d] + pe[t0 + t, d*C + c]
    tt = o_ref.shape[0]
    n_ch = x_ref.shape[0]

    # Rows of the resident PE table belonging to this T-tile.
    start = pl.multiple_of(pl.program_id(1) * tt, tt)
    pe_tile = pe_ref[pl.ds(start, tt), :]

    # Lane-concatenate the C narrow channel slices into one lane-dense
    # (TT, C*D) LHS: LHS[t, c*D + d] = x[c, t, d].  A single K = C*D matmul
    # then performs the whole channel interleave with MXU-internal
    # accumulation (one pop/store per output vreg).
    lhs = jnp.concatenate([x_ref[c] for c in range(n_ch)], axis=-1)

    out = pe_tile + jnp.dot(lhs, scat_ref[...], preferred_element_type=jnp.float32)
    o_ref[...] = out.astype(o_ref.dtype)


def _sinusoidal_pe(n_rows, dim):
    # Matches SinusoidalPositionalEncoding.__init__ (constant buffer), but only
    # the rows that are actually consumed.
    position = jnp.arange(n_rows, dtype=jnp.float32)[:, None]
    div_term = jnp.exp(jnp.arange(0, dim, 2, dtype=jnp.float32)
                       * (-math.log(10000.0) / dim))
    ang = position * div_term
    pe = jnp.zeros((n_rows, dim), dtype=jnp.float32)
    pe = pe.at[:, 0::2].set(jnp.sin(ang))
    pe = pe.at[:, 1::2].set(jnp.cos(ang))
    return pe


def _pick_t_tile(T, cap=512):
    # Largest multiple-of-8 divisor of T, capped (VMEM / pipeline-depth aware);
    # falls back to the full T dimension (always a legal block).
    cand = (min(T, cap) // 8) * 8
    while cand >= 8:
        if T % cand == 0:
            return cand
        cand -= 8
    return T


def partition_forward(x, *, patch_size, num_patches, batch_size, N_s,
                      max_len=5000, t_tile=None):
    """Pallas implementation of Partition.forward.

    x : (B, C, T, D) float32, B = batch_size * N_s, T = num_patches * patch_size
    returns (batch_size, N_s * num_patches, patch_size * D * C) float32
    """
    B, C, T, D = x.shape
    if num_patches > max_len:
        raise ValueError(f"Sequence length {num_patches} exceeds maximum length {max_len}")
    assert T % num_patches == 0, "Time frames must be divisible by num_patches."
    assert T == num_patches * patch_size
    assert B == batch_size * N_s
    J = D * C
    dim = patch_size * J

    if t_tile is None:
        t_tile = _pick_t_tile(T)
    assert T % t_tile == 0 and (t_tile % 8 == 0 or t_tile == T)

    # Constant buffers (built once, tiny).
    pe = _sinusoidal_pe(num_patches, dim)                    # (num_patches, dim)
    pe2d = pe.reshape(T, J)                                  # rows aligned with t (free)
    # One-hot scatter flattened to (C*D, J): row r = c*D + d -> column j = d*C + c,
    # matching the in-kernel lane concatenation order.
    d_idx = jnp.arange(D, dtype=jnp.int32)
    c_idx = jnp.arange(C, dtype=jnp.int32)
    j_idx = jnp.arange(J, dtype=jnp.int32)
    scat = (j_idx[None, None, :]
            == (d_idx[None, :, None] * C + c_idx[:, None, None])
            ).astype(x.dtype).reshape(C * D, J)

    # Advisory cost: a pure read+write pass routed through the (otherwise idle) MXU.
    flops = 2 * B * T * (C * D) * J
    bytes_accessed = 4 * (2 * B * T * J + T * J + C * D * J)

    out = pl.pallas_call(
        _partition_kernel,
        out_shape=jax.ShapeDtypeStruct((B, T, J), jnp.float32),
        grid=(B, T // t_tile),
        in_specs=[
            pl.BlockSpec((None, C, t_tile, D), lambda i, k: (i, 0, k, 0)),
            pl.BlockSpec((C * D, J), lambda i, k: (0, 0)),   # resident constant
            pl.BlockSpec((T, J), lambda i, k: (0, 0)),       # resident full PE table
        ],
        out_specs=pl.BlockSpec((None, t_tile, J), lambda i, k: (i, k, 0)),
        compiler_params=pltpu.CompilerParams(
            dimension_semantics=("parallel", "parallel")),
        cost_estimate=pl.CostEstimate(flops=flops, transcendentals=0,
                                      bytes_accessed=bytes_accessed),
    )(x, scat, pe2d)

    # Pure-metadata reshapes on contiguous data:
    # (B, T, D*C) -> (B, num_patches, dim) -> (batch_size, N_s*num_patches, dim).
    return out.reshape(batch_size, N_s * num_patches, dim)


def _reference(x, *, patch_size, num_patches, batch_size, N_s):
    # Pure-JAX transcription of Partition.forward (correctness check).
    B, C, T, D = x.shape
    dim = patch_size * D * C
    pe = _sinusoidal_pe(num_patches, dim)
    xp = jnp.transpose(x, (0, 2, 3, 1))                      # (B, T, D, C)
    xr = xp.reshape(B, num_patches, patch_size, D, C).reshape(B, num_patches, -1)
    xr = xr + pe[None]
    return xr.reshape(batch_size, N_s * num_patches, -1)


if __name__ == "__main__":
    key = jax.random.PRNGKey(0)

    # Small shapes consistent with the module: C=8 channels, D=16 features,
    # T = num_patches * patch_size, B = batch_size * N_s.
    batch_size, N_s = 2, 4
    C, D = 8, 16
    num_patches, patch_size = 4, 4
    T = num_patches * patch_size            # 16
    B = batch_size * N_s                    # 8

    x = jax.random.normal(key, (B, C, T, D), dtype=jnp.float32)

    ref = _reference(x, patch_size=patch_size, num_patches=num_patches,
                     batch_size=batch_size, N_s=N_s)

    # Default (perf-reviewed) tiling: full-T tile here, <=512-row tiles at real sizes.
    out = partition_forward(x, patch_size=patch_size, num_patches=num_patches,
                            batch_size=batch_size, N_s=N_s)
    out = jax.block_until_ready(out)
    assert out.shape == (batch_size, N_s * num_patches, patch_size * D * C)
    assert jnp.allclose(out, ref, atol=1e-5, rtol=1e-5)

    # Also exercise the multi-step inner grid / in-kernel PE slicing path.
    out_tiled = partition_forward(x, patch_size=patch_size, num_patches=num_patches,
                                  batch_size=batch_size, N_s=N_s, t_tile=8)
    out_tiled = jax.block_until_ready(out_tiled)
    assert jnp.allclose(out_tiled, ref, atol=1e-5, rtol=1e-5)

    print("KERNEL_OK")
</pallas_src>

<mosaic_0001>
module attributes {stable_mosaic.version = 11 : i64} {
  func.func @_partition_kernel(%arg0: i32, %arg1: i32, %arg2: memref<1x8x16x16xf32, #tpu.memory_space<vmem>>, %arg3: memref<128x128xf32, #tpu.memory_space<vmem>>, %arg4: memref<16x128xf32, #tpu.memory_space<vmem>>, %arg5: memref<1x16x128xf32, #tpu.memory_space<vmem>>) attributes {dimension_semantics = [#tpu.dimension_semantics<parallel>, #tpu.dimension_semantics<parallel>], iteration_bounds = array<i64: 8, 1>, scalar_prefetch = 0 : i64, scratch_operands = 0 : i64, tpu.core_type = #tpu.core_type<tc>, window_params = [{transform_indices = @transform_0, window_bounds = array<i64: 1, 8, 16, 16>}, {pipeline_mode = #tpu.pipeline_mode<synchronous>, transform_indices = @transform_1, window_bounds = array<i64: 128, 128>}, {pipeline_mode = #tpu.pipeline_mode<synchronous>, transform_indices = @transform_2, window_bounds = array<i64: 16, 128>}, {transform_indices = @transform_3, window_bounds = array<i64: 1, 16, 128>}]} {
    %c16_i32 = arith.constant 16 : i32
    %0 = arith.muli %arg1, %c16_i32 : i32
    %1 = tpu.assume_multiple %0, 16 : i32
    %2 = arith.index_cast %1 : i32 to index
    %c0 = arith.constant 0 : index
    %3 = vector.load %arg4[%2, %c0] : memref<16x128xf32, #tpu.memory_space<vmem>>, vector<16x128xf32>
    %c0_0 = arith.constant 0 : index
    %c0_1 = arith.constant 0 : index
    %c0_2 = arith.constant 0 : index
    %c0_3 = arith.constant 0 : index
    %4 = vector.load %arg2[%c0_0, %c0_1, %c0_2, %c0_3] : memref<1x8x16x16xf32, #tpu.memory_space<vmem>>, vector<1x1x16x16xf32>
    %5 = vector.shape_cast %4 : vector<1x1x16x16xf32> to vector<16x16xf32>
    %c0_4 = arith.constant 0 : index
    %c1 = arith.constant 1 : index
    %c0_5 = arith.constant 0 : index
    %c0_6 = arith.constant 0 : index
    %6 = vector.load %arg2[%c0_4, %c1, %c0_5, %c0_6] : memref<1x8x16x16xf32, #tpu.memory_space<vmem>>, vector<1x1x16x16xf32>
    %7 = vector.shape_cast %6 : vector<1x1x16x16xf32> to vector<16x16xf32>
    %c0_7 = arith.constant 0 : index
    %c2 = arith.constant 2 : index
    %c0_8 = arith.constant 0 : index
    %c0_9 = arith.constant 0 : index
    %8 = vector.load %arg2[%c0_7, %c2, %c0_8, %c0_9] : memref<1x8x16x16xf32, #tpu.memory_space<vmem>>, vector<1x1x16x16xf32>
    %9 = vector.shape_cast %8 : vector<1x1x16x16xf32> to vector<16x16xf32>
    %c0_10 = arith.constant 0 : index
    %c3 = arith.constant 3 : index
    %c0_11 = arith.constant 0 : index
    %c0_12 = arith.constant 0 : index
    %10 = vector.load %arg2[%c0_10, %c3, %c0_11, %c0_12] : memref<1x8x16x16xf32, #tpu.memory_space<vmem>>, vector<1x1x16x16xf32>
    %11 = vector.shape_cast %10 : vector<1x1x16x16xf32> to vector<16x16xf32>
    %c0_13 = arith.constant 0 : index
    %c4 = arith.constant 4 : index
    %c0_14 = arith.constant 0 : index
    %c0_15 = arith.constant 0 : index
    %12 = vector.load %arg2[%c0_13, %c4, %c0_14, %c0_15] : memref<1x8x16x16xf32, #tpu.memory_space<vmem>>, vector<1x1x16x16xf32>
    %13 = vector.shape_cast %12 : vector<1x1x16x16xf32> to vector<16x16xf32>
    %c0_16 = arith.constant 0 : index
    %c5 = arith.constant 5 : index
    %c0_17 = arith.constant 0 : index
    %c0_18 = arith.constant 0 : index
    %14 = vector.load %arg2[%c0_16, %c5, %c0_17, %c0_18] : memref<1x8x16x16xf32, #tpu.memory_space<vmem>>, vector<1x1x16x16xf32>
    %15 = vector.shape_cast %14 : vector<1x1x16x16xf32> to vector<16x16xf32>
    %c0_19 = arith.constant 0 : index
    %c6 = arith.constant 6 : index
    %c0_20 = arith.constant 0 : index
    %c0_21 = arith.constant 0 : index
    %16 = vector.load %arg2[%c0_19, %c6, %c0_20, %c0_21] : memref<1x8x16x16xf32, #tpu.memory_space<vmem>>, vector<1x1x16x16xf32>
    %17 = vector.shape_cast %16 : vector<1x1x16x16xf32> to vector<16x16xf32>
    %c0_22 = arith.constant 0 : index
    %c7 = arith.constant 7 : index
    %c0_23 = arith.constant 0 : index
    %c0_24 = arith.constant 0 : index
    %18 = vector.load %arg2[%c0_22, %c7, %c0_23, %c0_24] : memref<1x8x16x16xf32, #tpu.memory_space<vmem>>, vector<1x1x16x16xf32>
    %19 = vector.shape_cast %18 : vector<1x1x16x16xf32> to vector<16x16xf32>
    %20 = tpu.concatenate %5, %7, %9, %11, %13, %15, %17, %19 in 1 : vector<16x16xf32>, vector<16x16xf32>, vector<16x16xf32>, vector<16x16xf32>, vector<16x16xf32>, vector<16x16xf32>, vector<16x16xf32>, vector<16x16xf32> -> vector<16x128xf32>
    %c0_25 = arith.constant 0 : index
    %c0_26 = arith.constant 0 : index
    %21 = vector.load %arg3[%c0_25, %c0_26] : memref<128x128xf32, #tpu.memory_space<vmem>>, vector<128x128xf32>
    %cst = arith.constant dense<0.000000e+00> : vector<16x128xf32>
    %22 = tpu.matmul %20, %21, %cst {dimension_numbers = #tpu.dot_dimension_numbers<[1], [0], [0], [1], [0, 0, 1, 1], [], []>} : vector<16x128xf32>, vector<128x128xf32>, vector<16x128xf32> -> vector<16x128xf32>
    %23 = arith.addf %3, %22 : vector<16x128xf32>
    %c0_27 = arith.constant 0 : index
    %c0_28 = arith.constant 0 : index
    %c0_29 = arith.constant 0 : index
    %24 = vector.load %arg5[%c0_27, %c0_28, %c0_29] : memref<1x16x128xf32, #tpu.memory_space<vmem>>, vector<1x16x128xf32>
    %25 = vector.shape_cast %24 : vector<1x16x128xf32> to vector<16x128xf32>
    %26 = vector.shape_cast %23 : vector<16x128xf32> to vector<1x16x128xf32>
    tpu.vector_store %arg5[%c0_27, %c0_28, %c0_29], %26 {strides = array<i32>} : memref<1x16x128xf32, #tpu.memory_space<vmem>>, vector<1x16x128xf32>,
    return
  }
  func.func @transform_0(%arg0: i32, %arg1: i32) -> (i32, i32, i32, i32) {
    %c0_i32 = arith.constant 0 : i32
    %c0_i32_0 = arith.constant 0 : i32
    %c0_i32_1 = arith.constant 0 : i32
    return %arg0, %c0_i32, %arg1, %c0_i32_0 : i32, i32, i32, i32
  }
  func.func @transform_1(%arg0: i32, %arg1: i32) -> (i32, i32) {
    %c0_i32 = arith.constant 0 : i32
    %c0_i32_0 = arith.constant 0 : i32
    %c0_i32_1 = arith.constant 0 : i32
    return %c0_i32, %c0_i32_0 : i32, i32
  }
  func.func @transform_2(%arg0: i32, %arg1: i32) -> (i32, i32) {
    %c0_i32 = arith.constant 0 : i32
    %c0_i32_0 = arith.constant 0 : i32
    %c0_i32_1 = arith.constant 0 : i32
    return %c0_i32, %c0_i32_0 : i32, i32
  }
  func.func @transform_3(%arg0: i32, %arg1: i32) -> (i32, i32, i32) {
    %c0_i32 = arith.constant 0 : i32
    %c0_i32_0 = arith.constant 0 : i32
    return %arg0, %arg1, %c0_i32 : i32, i32, i32
  }
}

</mosaic_0001>

<llo_original>
// kernel: tpu_custom_call.1
$region0: #{tpu_custom_call.1}
  #allocation0 [shape = 'u32[]', space=smem, size = 0x4, offset = 0x4, fixed_abs, tag = 'smem constant byte address 0x4 - core index']
  #allocation1 [shape = 'u32[144,128]{1,0:T(1,128)}', space=vmem, size = 0x12000, scoped, tag = 'internal scratch']
  %s0 = inlined_call_operand.hbm [shape: f32[8,8,16,16], index: 0, kind: input, shape index: {}]
  %s1 = inlined_call_operand.hbm [shape: f32[128,128], index: 1, kind: input, shape index: {}]
  %s2 = inlined_call_operand.hbm [shape: f32[16,128], index: 2, kind: input, shape index: {}]
  %s3 = inlined_call_operand.hbm [shape: f32[8,16,128], index: 3, kind: output, shape index: {}]
  %s4 = sld [smem:[#allocation0]]
  $region57: #{tpu_custom_call.1} parent=0
    _
  %s6 = ssub.s32 1, %s4
  %s7 = scalar_select 0, %s6, %s4
  $region1: #{tpu_custom_call.1} parent=0
    #allocation2 [shape = 'u8[131072]{0}', space=vmem, size = 0x20000, scoped, tag = 'input window, operand 0']
    #allocation3 [shape = 's32[2]{0}', space=sflag, size = 0x8, scoped, tag = 'scoped memory for tpu_custom_call.1']
    #allocation4 [shape = 's32[2]{0}', space=sflag, size = 0x8, scoped, tag = 'scoped memory for tpu_custom_call.1']
    #allocation5 [shape = 'u8[65536]{0}', space=vmem, size = 0x10000, scoped, tag = 'input window, operand 1, single buffered']
    #allocation6 [shape = 's32[1]{0}', space=sflag, size = 0x4, scoped, tag = 'scoped memory for tpu_custom_call.1']
    #allocation7 [shape = 'u8[8192]{0}', space=vmem, size = 0x2000, scoped, tag = 'input window, operand 2, single buffered']
    #allocation8 [shape = 'u8[16384]{0}', space=vmem, size = 0x4000, scoped, tag = 'output window, operand 0']
    %8 = vsyncpa [#allocation3], 0
    %s9 = scalar_lea.sflag [#allocation3], 1
    %10 = vsyncpa %s9, 0
    %11 = vsyncpa [#allocation6], 0
    %12 = vsyncpa [#allocation4], 0
    %s13 = scalar_lea.sflag [#allocation4], 1
    %14 = vsyncpa %s13, 0
    loop: start=0, step=1, limit=10
    $region2: #{tpu_custom_call.1} parent=1 // loop_pre_header
      _
    $region3: #{tpu_custom_call.1} parent=1 // loop_header
      %s16 = sphi 0, %s20
      %p17 = scmp.ge.s32.totalorder %s16, 10
      %s23 = sphi 0, %s35
      %s24 = sphi 0, %s31
      %s25 = sphi 0, %s23
      %s26 = sphi 0, %s24
      %s27 = sphi 0, %s25
      %s28 = sphi 0, %s26
      %s40 = sphi 0, %s42
      %s43 = sphi 0, %s40
      %s44 = sphi 0, %s43
      %s60 = sphi 0, %s44
      %s64 = sphi 0, %s64
      %s66 = sphi 0, %s64
      %s67 = sphi 0, %s66
      %s81 = sphi 0, %s67
      %s85 = sphi 0, %s85
      %s87 = sphi 0, %s85
      %s88 = sphi 0, %s87
      %s102 = sphi 0, %s88
      %s110 = sphi 0, %s112
      %s113 = sphi 0, %s110
      %s114 = sphi 0, %s113
      %s130 = sphi 0, %s114
    $region4: #{tpu_custom_call.1} parent=1 // loop_header_branch
      %19 = sbr.rel (%p17) target = $region8
    $region5: #{tpu_custom_call.1} parent=1 // loop_body
      %s21 = ssub.s32 %s16, 1
      %s22 = ssub.s32 %s16, 2
      %s29 = sadd.s32 1, %s24
      %p30 = scmp.ge.s32.totalorder %s29, 1
      %s31 = scalar_select %p30, 0, %s29
      %s32 = sadd.s32 1, %s23
      %s33 = scalar_select %p30, %s32, %s23
      %p34 = scmp.ge.s32.totalorder %s33, 8
      %s35 = scalar_select %p34, 0, %s33
      %s36 = ssub.s32 %s23, %s35
      %s37 = ssub.s32 %s24, %s31
      %s38 = sor.u32 %s36, %s37
      %p39 = scmp.eq.s32.totalorder %s38, 0
      %s41 = sadd.s32 %s40, 1
      %s42 = scalar_select %p39, %s40, %s41
      %p45 = pneg %p39
      %p46 = scmp.eq.s32.totalorder %s16, 7
      %p47 = por %p45, %p46
      %p48 = scmp.ne.s32.totalorder %s40, %s43
      %p49 = scmp.eq.s32.totalorder %s16, 0
      %p50 = por %p48, %p49
      %p51 = scmp.ne.s32.totalorder %s40, %s43
      %p52 = scmp.eq.s32.totalorder %s21, 7
      %p53 = por %p51, %p52
      %p54 = scmp.ne.s32.totalorder %s43, %s44
      %p55 = scmp.eq.s32.totalorder %s21, 0
      %p56 = por %p54, %p55
      %p57 = scmp.ne.s32.totalorder %s43, %s44
      %p58 = scmp.eq.s32.totalorder %s22, 7
      %p59 = por %p57, %p58
      %p61 = scmp.ne.s32.totalorder %s44, %s60
      %p62 = scmp.eq.s32.totalorder %s22, 0
      %p63 = por %p61, %p62
      %s65 = sadd.s32 %s64, 1
      %p68 = scmp.eq.s32.totalorder %s16, 7
      %p69 = scmp.ne.s32.totalorder %s64, %s66
      %p70 = scmp.eq.s32.totalorder %s16, 0
      %p71 = por %p69, %p70
      %p72 = scmp.ne.s32.totalorder %s64, %s66
      %p73 = scmp.eq.s32.totalorder %s21, 7
      %p74 = por %p72, %p73
      %p75 = scmp.ne.s32.totalorder %s66, %s67
      %p76 = scmp.eq.s32.totalorder %s21, 0
      %p77 = por %p75, %p76
      %p78 = scmp.ne.s32.totalorder %s66, %s67
      %p79 = scmp.eq.s32.totalorder %s22, 7
      %p80 = por %p78, %p79
      %p82 = scmp.ne.s32.totalorder %s67, %s81
      %p83 = scmp.eq.s32.totalorder %s22, 0
      %p84 = por %p82, %p83
      %s86 = sadd.s32 %s85, 1
      %p89 = scmp.eq.s32.totalorder %s16, 7
      %p90 = scmp.ne.s32.totalorder %s85, %s87
      %p91 = scmp.eq.s32.totalorder %s16, 0
      %p92 = por %p90, %p91
      %p93 = scmp.ne.s32.totalorder %s85, %s87
      %p94 = scmp.eq.s32.totalorder %s21, 7
      %p95 = por %p93, %p94
      %p96 = scmp.ne.s32.totalorder %s87, %s88
      %p97 = scmp.eq.s32.totalorder %s21, 0
      %p98 = por %p96, %p97
      %p99 = scmp.ne.s32.totalorder %s87, %s88
      %p100 = scmp.eq.s32.totalorder %s22, 7
      %p101 = por %p99, %p100
      %p103 = scmp.ne.s32.totalorder %s88, %s102
      %p104 = scmp.eq.s32.totalorder %s22, 0
      %p105 = por %p103, %p104
      %s106 = ssub.s32 %s23, %s35
      %s107 = ssub.s32 %s24, %s31
      %s108 = sor.u32 %s106, %s107
      %p109 = scmp.eq.s32.totalorder %s108, 0
      %s111 = sadd.s32 %s110, 1
      %s112 = scalar_select %p109, %s110, %s111
      %p115 = pneg %p109
      %p116 = scmp.eq.s32.totalorder %s16, 7
      %p117 = por %p115, %p116
      %p118 = scmp.ne.s32.totalorder %s110, %s113
      %p119 = scmp.eq.s32.totalorder %s16, 0
      %p120 = por %p118, %p119
      %p121 = scmp.ne.s32.totalorder %s110, %s113
      %p122 = scmp.eq.s32.totalorder %s21, 7
      %p123 = por %p121, %p122
      %p124 = scmp.ne.s32.totalorder %s113, %s114
      %p125 = scmp.eq.s32.totalorder %s21, 0
      %p126 = por %p124, %p125
      %p127 = scmp.ne.s32.totalorder %s113, %s114
      %p128 = scmp.eq.s32.totalorder %s22, 7
      %p129 = por %p127, %p128
      %p131 = scmp.ne.s32.totalorder %s114, %s130
      %p132 = scmp.eq.s32.totalorder %s22, 0
      %p133 = por %p131, %p132
      %p134 = scmp.le.s32.totalorder 1, %s16
      %p135 = scmp.lt.s32.totalorder %s16, 9
      %p136 = pnand %p134, %p135
      %p137 = pneg %p136
      // Predicated region
      $region9: #{tpu_custom_call.1} parent=5 // pred_check
        _
      $region10: #{tpu_custom_call.1} parent=5 // pred_check_branch
        %139 = sbr.rel (%p136) target = $region12
      $region11: #{tpu_custom_call.1} parent=5 // pred_region
        %s140 = ssub.s32 %s16, 1
        // Predicated region
        $region13: #{tpu_custom_call.1} parent=11 // pred_check
          %p141 = pneg %p77
        $region14: #{tpu_custom_call.1} parent=11 // pred_check_branch
          %143 = sbr.rel (%p141) target = $region16
        $region15: #{tpu_custom_call.1} parent=11 // pred_region
          %s145 = ssub.s32 2048, 2048
          %146 = vsyncadd [#allocation6], %s145
          %s147 = sshll.u32 [#allocation5], 4
          %s148 = int_to_ptr.vmem [resolvable:$true] %s147
          %153 = dma.hbm_to_vmem [thread:$0]  %s1, 2048, %s148, [#allocation6], 128, 128, 8
        $region16: #{tpu_custom_call.1} parent=11 // pred_fallthru
          _
        // Predicated region
        $region17: #{tpu_custom_call.1} parent=11 // pred_check
          %p154 = pneg %p98
        $region18: #{tpu_custom_call.1} parent=11 // pred_check_branch
          %156 = sbr.rel (%p154) target = $region20
        $region19: #{tpu_custom_call.1} parent=11 // pred_region
          %s158 = ssub.s32 256, 256
          %159 = vsyncadd [#allocation6], %s158
          %s160 = sshll.u32 [#allocation7], 4
          %s161 = int_to_ptr.vmem [resolvable:$true] %s160
          %166 = dma.hbm_to_vmem [thread:$0]  %s2, 256, %s161, [#allocation6], 128, 128, 8
        $region20: #{tpu_custom_call.1} parent=11 // pred_fallthru
          _
      $region12: #{tpu_custom_call.1} parent=5 // pred_fallthru
        _
      %p167 = scmp.lt.s32.totalorder %s16, 8
      // Predicated region
      $region21: #{tpu_custom_call.1} parent=5 // pred_check
        %p168 = pneg %p167
      $region22: #{tpu_custom_call.1} parent=5 // pred_check_branch
        %170 = sbr.rel (%p168) target = $region24
      $region23: #{tpu_custom_call.1} parent=5 // pred_region
        // Predicated region
        $region25: #{tpu_custom_call.1} parent=23 // pred_check
          %p171 = pneg %p50
        $region26: #{tpu_custom_call.1} parent=23 // pred_check_branch
          %173 = sbr.rel (%p171) target = $region28
        $region27: #{tpu_custom_call.1} parent=23 // pred_region
          %s174 = sand.u32 %s40, 1
          %s175 = scalar_lea.sflag [#allocation3], %s174
          %s176 = sand.u32 %s40, 1
          %s177 = smul.addr %s176, 128
          %s178 = scalar_lea.vmem [#allocation2], %s177
          %s179 = smul.u32 2, %s24
          %s181 = ssub.s32 2048, 2048
          %182 = vsyncadd %s175, %s181
          %s183 = smul.addr %s23, 16
          %s184 = sadd.s32 %s179, %s183
          %s185 = smul.addr %s184, 128
          %s186 = scalar_lea.hbm %s0, %s185
          %s187 = sshll.u32 %s178, 4
          %s188 = int_to_ptr.vmem [resolvable:$true] %s187
          %193 = dma.hbm_to_vmem [thread:$0]  %s186, 2048, %s188, %s175, 128, 128, 8
        $region28: #{tpu_custom_call.1} parent=23 // pred_fallthru
          _
      $region24: #{tpu_custom_call.1} parent=5 // pred_fallthru
        _
      %p194 = scmp.le.s32.totalorder 1, %s16
      %p195 = scmp.lt.s32.totalorder %s16, 9
      %p196 = pnand %p194, %p195
      %p197 = pneg %p196
      // Predicated region
      $region29: #{tpu_custom_call.1} parent=5 // pred_check
        _
      $region30: #{tpu_custom_call.1} parent=5 // pred_check_branch
        %199 = sbr.rel (%p196) target = $region32
      $region31: #{tpu_custom_call.1} parent=5 // pred_region
        %s200 = ssub.s32 %s16, 1
        %s201 = sand.u32 %s43, 1
        %s202 = scalar_lea.sflag [#allocation3], %s201
        %s203 = sand.u32 %s43, 1
        %s204 = smul.addr %s203, 128
        %s205 = scalar_lea.vmem [#allocation2], %s204
        // Predicated region
        $region33: #{tpu_custom_call.1} parent=31 // pred_check
          %p206 = pneg %p56
        $region34: #{tpu_custom_call.1} parent=31 // pred_check_branch
          %208 = sbr.rel (%p206) target = $region36
        $region35: #{tpu_custom_call.1} parent=31 // pred_region
          %209 = dma.done %s202, 2048
        $region36: #{tpu_custom_call.1} parent=31 // pred_fallthru
          _
        // Predicated region
        $region37: #{tpu_custom_call.1} parent=31 // pred_check
          %p210 = pneg %p77
        $region38: #{tpu_custom_call.1} parent=31 // pred_check_branch
          %212 = sbr.rel (%p210) target = $region40
        $region39: #{tpu_custom_call.1} parent=31 // pred_region
          %213 = dma.done [#allocation6], 2048
        $region40: #{tpu_custom_call.1} parent=31 // pred_fallthru
          _
        // Predicated region
        $region41: #{tpu_custom_call.1} parent=31 // pred_check
          %p214 = pneg %p98
        $region42: #{tpu_custom_call.1} parent=31 // pred_check_branch
          %216 = sbr.rel (%p214) target = $region44
        $region43: #{tpu_custom_call.1} parent=31 // pred_region
          %217 = dma.done [#allocation6], 256
        $region44: #{tpu_custom_call.1} parent=31 // pred_fallthru
          _
        %s218 = sand.u32 %s43, 1
        %s219 = scalar_lea.sflag [#allocation3], %s218
        %s220 = sand.u32 %s43, 1
        %s221 = smul.addr %s220, 128
        %s222 = scalar_lea.vmem [#allocation2], %s221
        %p223 = pneg %p56
        %p224 = pneg %p53
        %p225 = pneg %p77
        %p226 = pneg %p74
        %p227 = pneg %p98
        %p228 = pneg %p95
        %p229 = pneg %p126
        %p230 = pneg %p123
        %s231 = sand.u32 %s113, 1
        %s232 = scalar_lea.sflag [#allocation4], %s231
        %s233 = sand.u32 %s113, 1
        %s234 = smul.addr %s233, 16
        %s235 = scalar_lea.vmem [#allocation8], %s234
        %s236 = smul.u32 2, %s26
        %s237 = smul.u32 2, %s26
        %s238 = smul.u32 %s26, 16
        %s239 = scalar_lea.vmem [#allocation7], %s238
        %v240 = vld [vmem:[%s239] sm:$0xff]
        %v241 = vld [vmem:[%s239 + $0x8] sm:$0xff]
        %v242 = vld [vmem:[%s205] sm:$0xff]
        %v243 = vld [vmem:[%s205 + $0x8] sm:$0xff]
        %s244 = scalar_lea.vmem %s205, 16 [#allocation2]
        %v245 = vld [vmem:[%s244] sm:$0xff]
        %v246 = vld [vmem:[%s244 + $0x8] sm:$0xff]
        %s247 = scalar_lea.vmem %s205, 32 [#allocation2]
        %v248 = vld [vmem:[%s247] sm:$0xff]
        %v249 = vld [vmem:[%s247 + $0x8] sm:$0xff]
        %s250 = scalar_lea.vmem %s205, 48 [#allocation2]
        %v251 = vld [vmem:[%s250] sm:$0xff]
        %v252 = vld [vmem:[%s250 + $0x8] sm:$0xff]
        %s253 = scalar_lea.vmem %s205, 64 [#allocation2]
        %v254 = vld [vmem:[%s253] sm:$0xff]
        %v255 = vld [vmem:[%s253 + $0x8] sm:$0xff]
        %s256 = scalar_lea.vmem %s205, 80 [#allocation2]
        %v257 = vld [vmem:[%s256] sm:$0xff]
        %v258 = vld [vmem:[%s256 + $0x8] sm:$0xff]
        %s259 = scalar_lea.vmem %s205, 96 [#allocation2]
        %v260 = vld [vmem:[%s259] sm:$0xff]
        %v261 = vld [vmem:[%s259 + $0x8] sm:$0xff]
        %s262 = scalar_lea.vmem %s205, 112 [#allocation2]
        %v263 = vld [vmem:[%s262] sm:$0xff]
        %v264 = vld [vmem:[%s262 + $0x8] sm:$0xff]
        %267 = vrot.lane.b32.xlu0 %v245, 16
        %v268 = vpop.permute.xlu0 %267
        %269 = vrot.lane.b32.xlu0 %v246, 16
        %v270 = vpop.permute.xlu0 %269
        %275 = vrot.lane.b32.xlu0 %v248, 32
        %v276 = vpop.permute.xlu0 %275
        %277 = vrot.lane.b32.xlu0 %v249, 32
        %v278 = vpop.permute.xlu0 %277
        %283 = vrot.lane.b32.xlu0 %v251, 48
        %v284 = vpop.permute.xlu0 %283
        %285 = vrot.lane.b32.xlu0 %v252, 48
        %v286 = vpop.permute.xlu0 %285
        %291 = vrot.lane.b32.xlu0 %v254, 64
        %v292 = vpop.permute.xlu0 %291
        %293 = vrot.lane.b32.xlu0 %v255, 64
        %v294 = vpop.permute.xlu0 %293
        %299 = vrot.lane.b32.xlu0 %v257, 80
        %v300 = vpop.permute.xlu0 %299
        %301 = vrot.lane.b32.xlu0 %v258, 80
        %v302 = vpop.permute.xlu0 %301
        %307 = vrot.lane.b32.xlu0 %v260, 96
        %v308 = vpop.permute.xlu0 %307
        %309 = vrot.lane.b32.xlu0 %v261, 96
        %v310 = vpop.permute.xlu0 %309
        %315 = vrot.lane.b32.xlu0 %v263, 112
        %v316 = vpop.permute.xlu0 %315
        %317 = vrot.lane.b32.xlu0 %v264, 112
        %v318 = vpop.permute.xlu0 %317
        %vm321 = vcmask 130048
        %v322 = vsel %vm321, %v242, %v268
        %v323 = vsel %vm321, %v243, %v270
        %vm324 = vcmask 261120
        %v325 = vsel %vm324, %v322, %v276
        %v326 = vsel %vm324, %v323, %v278
        %vm327 = vcmask 392192
        %v328 = vsel %vm327, %v325, %v284
        %v329 = vsel %vm327, %v326, %v286
        %vm330 = vcmask 523264
        %v331 = vsel %vm330, %v328, %v292
        %v332 = vsel %vm330, %v329, %v294
        %vm333 = vcmask 654336
        %v334 = vsel %vm333, %v331, %v300
        %v335 = vsel %vm333, %v332, %v302
        %vm336 = vcmask 785408
        %v337 = vsel %vm336, %v334, %v308
        %v338 = vsel %vm336, %v335, %v310
        %vm339 = vcmask 916480
        %v340 = vsel %vm339, %v337, %v316
        %v341 = vsel %vm339, %v338, %v318
        %v342 = vld [vmem:[#allocation5] sm:$0xff]
        %v343 = vld [vmem:[#allocation5 + $0x8] sm:$0xff]
        %v344 = vld [vmem:[#allocation5 + $0x10] sm:$0xff]
        %v345 = vld [vmem:[#allocation5 + $0x18] sm:$0xff]
        %v346 = vld [vmem:[#allocation5 + $0x20] sm:$0xff]
        %v347 = vld [vmem:[#allocation5 + $0x28] sm:$0xff]
        %v348 = vld [vmem:[#allocation5 + $0x30] sm:$0xff]
        %v349 = vld [vmem:[#allocation5 + $0x38] sm:$0xff]
        %v350 = vld [vmem:[#allocation5 + $0x40] sm:$0xff]
        %v351 = vld [vmem:[#allocation5 + $0x48] sm:$0xff]
        %v352 = vld [vmem:[#allocation5 + $0x50] sm:$0xff]
        %v353 = vld [vmem:[#allocation5 + $0x58] sm:$0xff]
        %v354 = vld [vmem:[#allocation5 + $0x60] sm:$0xff]
        %v355 = vld [vmem:[#allocation5 + $0x68] sm:$0xff]
        %v356 = vld [vmem:[#allocation5 + $0x70] sm:$0xff]
        %v357 = vld [vmem:[#allocation5 + $0x78] sm:$0xff]
        %358 = vmatprep.subr.mxu0 0.0
        %359 = vmatpush1.msra.mxu0 %v357
        %360 = vmatprep.subr.mxu0 0.0
        %361 = vmatpush1.msra.mxu0 %v356
        %362 = vmatprep.subr.mxu0 0.0
        %363 = vmatpush1.msra.mxu0 %v355
        %364 = vmatprep.subr.mxu0 0.0
        %365 = vmatpush1.msra.mxu0 %v354
        %366 = vmatprep.subr.mxu0 0.0
        %367 = vmatpush1.msra.mxu0 %v353
        %368 = vmatprep.subr.mxu0 0.0
        %369 = vmatpush1.msra.mxu0 %v352
        %370 = vmatprep.subr.mxu0 0.0
        %371 = vmatpush1.msra.mxu0 %v351
        %372 = vmatprep.subr.mxu0 0.0
        %373 = vmatpush1.msra.mxu0 %v350
        %374 = vmatprep.subr.mxu0 0.0
        %375 = vmatpush1.msra.mxu0 %v349
        %376 = vmatprep.subr.mxu0 0.0
        %377 = vmatpush1.msra.mxu0 %v348
        %378 = vmatprep.subr.mxu0 0.0
        %379 = vmatpush1.msra.mxu0 %v347
        %380 = vmatprep.subr.mxu0 0.0
        %381 = vmatpush1.msra.mxu0 %v346
        %382 = vmatprep.subr.mxu0 0.0
        %383 = vmatpush1.msra.mxu0 %v345
        %384 = vmatprep.subr.mxu0 0.0
        %385 = vmatpush1.msra.mxu0 %v344
        %386 = vmatprep.subr.mxu0 0.0
        %387 = vmatpush1.msra.mxu0 %v343
        %388 = vmatprep.subr.mxu0 0.0
        %389 = vmatpush1.msra.mxu0 %v342
        %390 = vmatprep.subr.mxu0 0.0
        %391 = vmatpush2.msra.mxu0 0.0
        %392 = vmatprep.subr.mxu0 0.0
        %393 = vmatpush2.msra.mxu0 0.0
        %394 = vmatprep.subr.mxu0 0.0
        %395 = vmatpush2.msra.mxu0 0.0
        %396 = vmatprep.subr.mxu0 0.0
        %397 = vmatpush2.msra.mxu0 0.0
        %398 = vmatprep.subr.mxu0 0.0
        %399 = vmatpush2.msra.mxu0 0.0
        %400 = vmatprep.subr.mxu0 0.0
        %401 = vmatpush2.msra.mxu0 0.0
        %402 = vmatprep.subr.mxu0 0.0
        %403 = vmatpush2.msra.mxu0 0.0
        %404 = vmatprep.subr.mxu0 0.0
        %405 = vmatpush2.msra.mxu0 0.0
        %406 = vmatprep.subr.mxu0 0.0
        %407 = vmatpush2.msra.mxu0 0.0
        %408 = vmatprep.subr.mxu0 0.0
        %409 = vmatpush2.msra.mxu0 0.0
        %410 = vmatprep.subr.mxu0 0.0
        %411 = vmatpush2.msra.mxu0 0.0
        %412 = vmatprep.subr.mxu0 0.0
        %413 = vmatpush2.msra.mxu0 0.0
        %414 = vmatprep.subr.mxu0 0.0
        %415 = vmatpush2.msra.mxu0 0.0
        %416 = vmatprep.subr.mxu0 0.0
        %417 = vmatpush2.msra.mxu0 0.0
        %418 = vmatprep.subr.mxu0 0.0
        %419 = vmatpush2.msra.mxu0 0.0
        %420 = vmatprep.subr.mxu0 0.0
        %421 = vmatpush2.msra.mxu0 0.0
        %422 = vmatprep.mubr.f32.mxu0 0.0
        %423 = vmatmul.mubr.f32.gmra.mxu0 %v340
        %v424 = vpop.f32.mrf.mxu0
        %v425 = vadd.f32 0.0, %v424
        %v426 = vpop.f32.mrf.mxu0
        %427 = vmatprep.mubr.f32.mxu0 0.0
        %428 = vmatmul.mubr.f32.gmra.mxu0 %v341
        %v429 = vpop.f32.mrf.mxu0
        %v430 = vadd.f32 0.0, %v429
        %v431 = vpop.f32.mrf.mxu0
        %432 = vdwg.mxu0
        %v433 = vadd.f32 %v240, %v425
        %v434 = vadd.f32 %v241, %v430
        %435 = vst [vmem:[%s235] sm:$0xff] %v433
        %436 = vst [vmem:[%s235 + $0x8] sm:$0xff] %v434
        %s437 = sand.u32 %s113, 1
        %s438 = scalar_lea.sflag [#allocation4], %s437
        %s439 = sand.u32 %s113, 1
        %s440 = smul.addr %s439, 16
        %s441 = scalar_lea.vmem [#allocation8], %s440
        // Predicated region
        $region45: #{tpu_custom_call.1} parent=31 // pred_check
          %p442 = pneg %p123
        $region46: #{tpu_custom_call.1} parent=31 // pred_check_branch
          %444 = sbr.rel (%p442) target = $region48
        $region47: #{tpu_custom_call.1} parent=31 // pred_region
          %s445 = smul.u32 2, %s26
          %s447 = ssub.s32 256, 256
          %448 = vsyncadd %s438, %s447
          %s449 = smul.addr %s25, 2
          %s450 = sadd.s32 %s445, %s449
          %s451 = smul.addr %s450, 128
          %s452 = scalar_lea.hbm %s3, %s451
          %s453 = sshll.u32 %s441, 4
          %s454 = int_to_ptr.vmem [resolvable:$true] %s453
          %459 = dma.vmem_to_hbm [thread:$0]  %s454, 256, %s452, %s438, 128, 128, 8
        $region48: #{tpu_custom_call.1} parent=31 // pred_fallthru
          _
      $region32: #{tpu_custom_call.1} parent=5 // pred_fallthru
        _
      %p460 = scmp.le.s32.totalorder 2, %s16
      // Predicated region
      $region49: #{tpu_custom_call.1} parent=5 // pred_check
        %p461 = pneg %p460
      $region50: #{tpu_custom_call.1} parent=5 // pred_check_branch
        %463 = sbr.rel (%p461) target = $region52
      $region51: #{tpu_custom_call.1} parent=5 // pred_region
        %s464 = ssub.s32 %s16, 2
        // Predicated region
        $region53: #{tpu_custom_call.1} parent=51 // pred_check
          %p465 = pneg %p129
        $region54: #{tpu_custom_call.1} parent=51 // pred_check_branch
          %467 = sbr.rel (%p465) target = $region56
        $region55: #{tpu_custom_call.1} parent=51 // pred_region
          %s468 = sand.u32 %s114, 1
          %s469 = scalar_lea.sflag [#allocation4], %s468
          %s470 = sand.u32 %s114, 1
          %s471 = smul.addr %s470, 16
          %s472 = scalar_lea.vmem [#allocation8], %s471
          %473 = dma.done %s469, 256
        $region56: #{tpu_custom_call.1} parent=51 // pred_fallthru
          _
      $region52: #{tpu_custom_call.1} parent=5 // pred_fallthru
        _
    $region6: #{tpu_custom_call.1} parent=1 // loop_footer
      %s20 = sadd.s32 1, %s16
    $region7: #{tpu_custom_call.1} parent=1 // loop_footer_branch
      %15 = sbr.rel target = $region3
    $region8: #{tpu_custom_call.1} parent=1 // loop_exit
      _
    %474 = vsyncpa [#allocation3], 1
    %s475 = scalar_lea.sflag [#allocation3], 1
    %476 = vsyncpa %s475, 1
    %477 = vsyncpa [#allocation6], 1
    %478 = vsyncpa [#allocation4], 1
    %s479 = scalar_lea.sflag [#allocation4], 1
    %480 = vsyncpa %s479, 1

</llo_original>
